<compile_context>
chip_gen: v5e
topology: v5e:2x2
jax: 0.10.0
libtpu: 0.0.40
codegen_flags: <defaults>
</compile_context>

<pallas_src>
import functools

import jax
import jax.numpy as jnp
from jax.experimental import pallas as pl
from jax.experimental.pallas import tpu as pltpu


def _round_up(x, m):
    return ((x + m - 1) // m) * m


def _cdiv(a, b):
    return (a + b - 1) // b


# --------------------------------------------------------------------------
# Kernel
# --------------------------------------------------------------------------
def vae_fwd_kernel(
    x_ref,
    w_enc1_ref, b_enc1_ref,
    w_lat_ref, b_lat_ref,        # fused latent heads: [H1p, 2*Z], [1, 2*Z]
    w_dec1_ref, b_dec1_ref,
    w_dec2_ref, b_dec2_ref,
    o_ref, mu_ref, rho_ref,      # three direct outputs (no wrapper slicing)
    *, z_dim,
):
    x = x_ref[...]
    cdt = x.dtype  # MXU operand dtype (bf16 by default); accumulation is f32.

    # Encoder: Linear -> ReLU  (bias/ReLU epilogue in f32 on the VPU).
    h1 = jnp.dot(x, w_enc1_ref[...], preferred_element_type=jnp.float32)
    h1 = jnp.maximum(h1 + b_enc1_ref[...], 0.0).astype(cdt)

    # Fused latent heads: one matmul produces (mu | rho).
    lat = jnp.dot(h1, w_lat_ref[...], preferred_element_type=jnp.float32)
    lat = lat + b_lat_ref[...]
    mu = lat[:, :z_dim]
    rho = lat[:, z_dim:]

    # Eval-mode latent sample: z = mu.
    z = mu.astype(cdt)

    # Decoder: Linear -> ReLU -> Linear (no activation on dec2).
    hd = jnp.dot(z, w_dec1_ref[...], preferred_element_type=jnp.float32)
    hd = jnp.maximum(hd + b_dec1_ref[...], 0.0).astype(cdt)
    o = jnp.dot(hd, w_dec2_ref[...], preferred_element_type=jnp.float32)
    o = o + b_dec2_ref[...]

    # Direct sub-stores (no in-register concatenate).
    o_ref[...] = o.astype(o_ref.dtype)
    mu_ref[...] = mu.astype(mu_ref.dtype)
    rho_ref[...] = rho.astype(rho_ref.dtype)


# --------------------------------------------------------------------------
# One-time parameter preparation (fusion + padding + dtype casts hoisted here)
# --------------------------------------------------------------------------
def prepare_params(params, *, compute_dtype=jnp.bfloat16):
    """Pack params once: fuse mu/rho heads, zero-pad hidden dims to 128 lanes,
    cast weights to the MXU compute dtype (biases stay f32). Results are exact
    (padding is with zeros)."""
    D_in, H_enc1 = params["w_enc1"].shape
    Z = params["w_mu"].shape[1]
    H_dec1 = params["w_dec1"].shape[1]

    H1p = _round_up(H_enc1, 128)   # lane-dense hidden dims (internal only)
    Hd1p = _round_up(H_dec1, 128)

    def pad2(a, rows, cols):
        return jnp.pad(a, ((0, rows - a.shape[0]), (0, cols - a.shape[1])))

    w_lat = jnp.concatenate([params["w_mu"], params["w_rho"]], axis=1)
    b_lat = jnp.concatenate([params["b_mu"], params["b_rho"]], axis=1)

    return dict(
        w_enc1=pad2(params["w_enc1"], D_in, H1p).astype(compute_dtype),
        b_enc1=pad2(params["b_enc1"], 1, H1p).astype(jnp.float32),
        w_lat=pad2(w_lat, H1p, 2 * Z).astype(compute_dtype),
        b_lat=b_lat.astype(jnp.float32),
        w_dec1=pad2(params["w_dec1"], Z, Hd1p).astype(compute_dtype),
        b_dec1=pad2(params["b_dec1"], 1, Hd1p).astype(jnp.float32),
        w_dec2=pad2(params["w_dec2"], Hd1p, D_in).astype(compute_dtype),
        b_dec2=params["b_dec2"].astype(jnp.float32),
    )


# --------------------------------------------------------------------------
# Forward wrapper
# --------------------------------------------------------------------------
def vae_reg1_forward(x, prepared, *, tile_n=1024):
    """VAE_reg1 forward with a Pallas TPU kernel.

    x: [N, D_in] (or [D_in] -> treated as batch of 1).
    prepared: output of prepare_params().
    Returns (o_estimation [N, D_in], mu [N, Z], rho [N, Z]) as f32.
    """
    if x.ndim == 1:
        x = x[None, :]
    N, D_in = x.shape

    w_enc1 = prepared["w_enc1"]; b_enc1 = prepared["b_enc1"]
    w_lat = prepared["w_lat"];   b_lat = prepared["b_lat"]
    w_dec1 = prepared["w_dec1"]; b_dec1 = prepared["b_dec1"]
    w_dec2 = prepared["w_dec2"]; b_dec2 = prepared["b_dec2"]

    cdt = w_enc1.dtype
    cdt_bytes = w_enc1.dtype.itemsize
    H1p = w_enc1.shape[1]
    Z2 = w_lat.shape[1]
    Z = Z2 // 2
    Hd1p = w_dec1.shape[1]
    assert w_enc1.shape[0] == D_in and w_dec2.shape[1] == D_in

    # ---- batch tile selection -------------------------------------------
    tile_n = _round_up(max(8, tile_n), 8)
    tile_n = min(tile_n, _round_up(N, 8))
    # v7x has 2 TensorCores: keep >= 2 grid steps whenever the batch permits.
    tile_n = min(tile_n, max(8, _round_up(_cdiv(N, 2), 8)))

    # ---- explicit VMEM budget (weights are double-buffered by default) ----
    weight_vmem = (2 * cdt_bytes * (D_in * H1p + H1p * Z2 + Z * Hd1p + Hd1p * D_in)
                   + 2 * 4 * (H1p + Z2 + Hd1p + D_in))

    def vmem_est(t):
        io = 2 * t * D_in * cdt_bytes + 2 * t * (D_in + Z2) * 4  # x + 3 outputs
        inter = t * (H1p + Z2 + Hd1p) * 4                        # f32 temps
        return weight_vmem + io + inter

    budget = 26 * 1024 * 1024  # headroom under the 32 MiB scoped default
    while tile_n > 8 and vmem_est(tile_n) > budget:
        tile_n = max(8, _round_up(tile_n // 2, 8))

    vmem_limit = None
    est = vmem_est(tile_n)
    if est > 30 * 1024 * 1024:
        # Weights alone blow the default scoped limit -> raise it, staying well
        # under v7x's 64 MiB physical VMEM per TensorCore.
        vmem_limit = min(_round_up(int(est * 1.25), 1 << 20), 48 * 1024 * 1024)

    grid = (_cdiv(N, tile_n),)  # ragged last block handled by Pallas

    # Resident (per-step constant) weight/bias blocks.
    def _resident(shape):
        return pl.BlockSpec(shape, lambda i: (0, 0))

    in_specs = [
        pl.BlockSpec((tile_n, D_in), lambda i: (i, 0)),   # x tile over batch
        _resident((D_in, H1p)), _resident((1, H1p)),
        _resident((H1p, Z2)), _resident((1, Z2)),
        _resident((Z, Hd1p)), _resident((1, Hd1p)),
        _resident((Hd1p, D_in)), _resident((1, D_in)),
    ]
    out_specs = [
        pl.BlockSpec((tile_n, D_in), lambda i: (i, 0)),   # o
        pl.BlockSpec((tile_n, Z), lambda i: (i, 0)),      # mu
        pl.BlockSpec((tile_n, Z), lambda i: (i, 0)),      # rho
    ]
    out_shape = (
        jax.ShapeDtypeStruct((N, D_in), jnp.float32),
        jax.ShapeDtypeStruct((N, Z), jnp.float32),
        jax.ShapeDtypeStruct((N, Z), jnp.float32),
    )

    matmul_elems = D_in * H1p + H1p * Z2 + Z * Hd1p + Hd1p * D_in
    cost = pl.CostEstimate(
        flops=int(2 * N * matmul_elems),
        transcendentals=0,
        bytes_accessed=int(N * D_in * cdt_bytes
                           + cdt_bytes * matmul_elems
                           + 4 * (H1p + Z2 + Hd1p + D_in)
                           + N * (D_in + Z2) * 4),
    )

    kernel = functools.partial(vae_fwd_kernel, z_dim=Z)

    o, mu, rho = pl.pallas_call(
        kernel,
        out_shape=out_shape,
        grid_spec=pltpu.PrefetchScalarGridSpec(
            num_scalar_prefetch=0,
            grid=grid,
            in_specs=in_specs,
            out_specs=out_specs,
        ),
        compiler_params=pltpu.CompilerParams(
            dimension_semantics=("parallel",),   # batch axis: shard across TCs
            vmem_limit_bytes=vmem_limit,
        ),
        cost_estimate=cost,
    )(
        x.astype(cdt),
        w_enc1, b_enc1, w_lat, b_lat, w_dec1, b_dec1, w_dec2, b_dec2,
    )
    return o, mu, rho


# --------------------------------------------------------------------------
# Reference + init
# --------------------------------------------------------------------------
def init_params(key, D_in, H_enc1, Z_dim, H_dec1):
    """Deterministic parameter init (weights as [in, out], biases as [1, out])."""
    ks = jax.random.split(key, 10)

    def lin(kw, kb, fan_in, fan_out):
        bound = 1.0 / jnp.sqrt(fan_in)
        w = jax.random.uniform(kw, (fan_in, fan_out), jnp.float32, -bound, bound)
        b = jax.random.uniform(kb, (1, fan_out), jnp.float32, -bound, bound)
        return w, b

    w_enc1, b_enc1 = lin(ks[0], ks[1], D_in, H_enc1)
    w_mu, b_mu = lin(ks[2], ks[3], H_enc1, Z_dim)
    w_rho, b_rho = lin(ks[4], ks[5], H_enc1, Z_dim)
    w_dec1, b_dec1 = lin(ks[6], ks[7], Z_dim, H_dec1)
    w_dec2, b_dec2 = lin(ks[8], ks[9], H_dec1, D_in)
    return dict(
        w_enc1=w_enc1, b_enc1=b_enc1,
        w_mu=w_mu, b_mu=b_mu,
        w_rho=w_rho, b_rho=b_rho,
        w_dec1=w_dec1, b_dec1=b_dec1,
        w_dec2=w_dec2, b_dec2=b_dec2,
    )


def vae_reg1_forward_ref(x, p):
    """Pure-JAX f32 reference for correctness check."""
    h1 = jnp.maximum(x @ p["w_enc1"] + p["b_enc1"], 0.0)
    mu = h1 @ p["w_mu"] + p["b_mu"]
    rho = h1 @ p["w_rho"] + p["b_rho"]
    z = mu
    hd = jnp.maximum(z @ p["w_dec1"] + p["b_dec1"], 0.0)
    o = hd @ p["w_dec2"] + p["b_dec2"]
    return o, mu, rho


if __name__ == "__main__":
    # Small shapes consistent with the module: x is [Nbatch, D_in].
    N, D_in, H_enc1, Z_dim, H_dec1 = 16, 32, 32, 16, 32

    key = jax.random.PRNGKey(0)
    k_x, k_p = jax.random.split(key)
    x = jax.random.normal(k_x, (N, D_in), dtype=jnp.float32)
    params = init_params(k_p, D_in, H_enc1, Z_dim, H_dec1)
    o_ref, mu_ref, rho_ref = vae_reg1_forward_ref(x, params)

    # Case 1: f32 compute path — exact match against the f32 reference.
    prep_f32 = prepare_params(params, compute_dtype=jnp.float32)
    o, mu, rho = vae_reg1_forward(x, prep_f32)
    jax.block_until_ready((o, mu, rho))
    assert jnp.allclose(o, o_ref, atol=1e-5, rtol=1e-5)
    assert jnp.allclose(mu, mu_ref, atol=1e-5, rtol=1e-5)
    assert jnp.allclose(rho, rho_ref, atol=1e-5, rtol=1e-5)

    # Case 2: default bf16 MXU path — looser tolerance vs the f32 reference.
    prep_bf16 = prepare_params(params)
    o_b, mu_b, rho_b = vae_reg1_forward(x, prep_bf16)
    jax.block_until_ready((o_b, mu_b, rho_b))
    assert jnp.allclose(o_b, o_ref, atol=5e-2, rtol=5e-2)
    assert jnp.allclose(mu_b, mu_ref, atol=5e-2, rtol=5e-2)
    assert jnp.allclose(rho_b, rho_ref, atol=5e-2, rtol=5e-2)

    # Case 3: batch not a multiple of the batch tile (ragged last grid block).
    N2 = 20
    x2 = jax.random.normal(jax.random.PRNGKey(1), (N2, D_in), dtype=jnp.float32)
    o2, mu2, rho2 = vae_reg1_forward(x2, prep_f32)
    jax.block_until_ready((o2, mu2, rho2))
    o2_ref, mu2_ref, rho2_ref = vae_reg1_forward_ref(x2, params)
    assert jnp.allclose(o2, o2_ref, atol=1e-5, rtol=1e-5)
    assert jnp.allclose(mu2, mu2_ref, atol=1e-5, rtol=1e-5)
    assert jnp.allclose(rho2, rho2_ref, atol=1e-5, rtol=1e-5)

    print("KERNEL_OK")
</pallas_src>

<mosaic_0001>
module attributes {stable_mosaic.version = 11 : i64} {
  func.func @vae_fwd_kernel(%arg0: i32, %arg1: memref<8x32xf32, #tpu.memory_space<vmem>>, %arg2: memref<32x128xf32, #tpu.memory_space<vmem>>, %arg3: memref<1x128xf32, #tpu.memory_space<vmem>>, %arg4: memref<128x32xf32, #tpu.memory_space<vmem>>, %arg5: memref<1x32xf32, #tpu.memory_space<vmem>>, %arg6: memref<16x128xf32, #tpu.memory_space<vmem>>, %arg7: memref<1x128xf32, #tpu.memory_space<vmem>>, %arg8: memref<128x32xf32, #tpu.memory_space<vmem>>, %arg9: memref<1x32xf32, #tpu.memory_space<vmem>>, %arg10: memref<8x32xf32, #tpu.memory_space<vmem>>, %arg11: memref<8x16xf32, #tpu.memory_space<vmem>>, %arg12: memref<8x16xf32, #tpu.memory_space<vmem>>) attributes {dimension_semantics = [#tpu.dimension_semantics<parallel>], iteration_bounds = array<i64: 2>, scalar_prefetch = 0 : i64, scratch_operands = 0 : i64, tpu.core_type = #tpu.core_type<tc>, window_params = [{transform_indices = @transform_0, window_bounds = array<i64: 8, 32>}, {pipeline_mode = #tpu.pipeline_mode<synchronous>, transform_indices = @transform_1, window_bounds = array<i64: 32, 128>}, {pipeline_mode = #tpu.pipeline_mode<synchronous>, transform_indices = @transform_2, window_bounds = array<i64: 1, 128>}, {pipeline_mode = #tpu.pipeline_mode<synchronous>, transform_indices = @transform_3, window_bounds = array<i64: 128, 32>}, {pipeline_mode = #tpu.pipeline_mode<synchronous>, transform_indices = @transform_4, window_bounds = array<i64: 1, 32>}, {pipeline_mode = #tpu.pipeline_mode<synchronous>, transform_indices = @transform_5, window_bounds = array<i64: 16, 128>}, {pipeline_mode = #tpu.pipeline_mode<synchronous>, transform_indices = @transform_6, window_bounds = array<i64: 1, 128>}, {pipeline_mode = #tpu.pipeline_mode<synchronous>, transform_indices = @transform_7, window_bounds = array<i64: 128, 32>}, {pipeline_mode = #tpu.pipeline_mode<synchronous>, transform_indices = @transform_8, window_bounds = array<i64: 1, 32>}, {transform_indices = @transform_9, window_bounds = array<i64: 8, 32>}, {transform_indices = @transform_10, window_bounds = array<i64: 8, 16>}, {transform_indices = @transform_11, window_bounds = array<i64: 8, 16>}]} {
    %c0 = arith.constant 0 : index
    %c0_0 = arith.constant 0 : index
    %0 = vector.load %arg1[%c0, %c0_0] : memref<8x32xf32, #tpu.memory_space<vmem>>, vector<8x32xf32>
    %c0_1 = arith.constant 0 : index
    %c0_2 = arith.constant 0 : index
    %1 = vector.load %arg2[%c0_1, %c0_2] : memref<32x128xf32, #tpu.memory_space<vmem>>, vector<32x128xf32>
    %cst = arith.constant dense<0.000000e+00> : vector<8x128xf32>
    %2 = tpu.matmul %0, %1, %cst {dimension_numbers = #tpu.dot_dimension_numbers<[1], [0], [0], [1], [0, 0, 1, 1], [], []>} : vector<8x32xf32>, vector<32x128xf32>, vector<8x128xf32> -> vector<8x128xf32>
    %c0_3 = arith.constant 0 : index
    %c0_4 = arith.constant 0 : index
    %3 = vector.load %arg3[%c0_3, %c0_4] : memref<1x128xf32, #tpu.memory_space<vmem>>, vector<1x128xf32>
    %4 = vector.broadcast %3 : vector<1x128xf32> to vector<8x128xf32>
    %5 = arith.addf %2, %4 : vector<8x128xf32>
    %cst_5 = arith.constant 0.000000e+00 : f32
    %6 = vector.broadcast %cst_5 : f32 to vector<8x128xf32>
    %7 = arith.maximumf %5, %6 : vector<8x128xf32>
    %c0_6 = arith.constant 0 : index
    %c0_7 = arith.constant 0 : index
    %8 = vector.load %arg4[%c0_6, %c0_7] : memref<128x32xf32, #tpu.memory_space<vmem>>, vector<128x32xf32>
    %cst_8 = arith.constant dense<0.000000e+00> : vector<8x32xf32>
    %9 = tpu.matmul %7, %8, %cst_8 {dimension_numbers = #tpu.dot_dimension_numbers<[1], [0], [0], [1], [0, 0, 1, 1], [], []>} : vector<8x128xf32>, vector<128x32xf32>, vector<8x32xf32> -> vector<8x32xf32>
    %c0_9 = arith.constant 0 : index
    %c0_10 = arith.constant 0 : index
    %10 = vector.load %arg5[%c0_9, %c0_10] : memref<1x32xf32, #tpu.memory_space<vmem>>, vector<1x32xf32>
    %11 = vector.broadcast %10 : vector<1x32xf32> to vector<8x32xf32>
    %12 = arith.addf %9, %11 : vector<8x32xf32>
    %13 = vector.extract_strided_slice %12 {offsets = [0, 0], sizes = [8, 16], strides = [1, 1]} : vector<8x32xf32> to vector<8x16xf32>
    %14 = vector.extract_strided_slice %12 {offsets = [0, 16], sizes = [8, 16], strides = [1, 1]} : vector<8x32xf32> to vector<8x16xf32>
    %c0_11 = arith.constant 0 : index
    %c0_12 = arith.constant 0 : index
    %15 = vector.load %arg6[%c0_11, %c0_12] : memref<16x128xf32, #tpu.memory_space<vmem>>, vector<16x128xf32>
    %cst_13 = arith.constant dense<0.000000e+00> : vector<8x128xf32>
    %16 = tpu.matmul %13, %15, %cst_13 {dimension_numbers = #tpu.dot_dimension_numbers<[1], [0], [0], [1], [0, 0, 1, 1], [], []>} : vector<8x16xf32>, vector<16x128xf32>, vector<8x128xf32> -> vector<8x128xf32>
    %c0_14 = arith.constant 0 : index
    %c0_15 = arith.constant 0 : index
    %17 = vector.load %arg7[%c0_14, %c0_15] : memref<1x128xf32, #tpu.memory_space<vmem>>, vector<1x128xf32>
    %18 = vector.broadcast %17 : vector<1x128xf32> to vector<8x128xf32>
    %19 = arith.addf %16, %18 : vector<8x128xf32>
    %cst_16 = arith.constant 0.000000e+00 : f32
    %20 = vector.broadcast %cst_16 : f32 to vector<8x128xf32>
    %21 = arith.maximumf %19, %20 : vector<8x128xf32>
    %c0_17 = arith.constant 0 : index
    %c0_18 = arith.constant 0 : index
    %22 = vector.load %arg8[%c0_17, %c0_18] : memref<128x32xf32, #tpu.memory_space<vmem>>, vector<128x32xf32>
    %cst_19 = arith.constant dense<0.000000e+00> : vector<8x32xf32>
    %23 = tpu.matmul %21, %22, %cst_19 {dimension_numbers = #tpu.dot_dimension_numbers<[1], [0], [0], [1], [0, 0, 1, 1], [], []>} : vector<8x128xf32>, vector<128x32xf32>, vector<8x32xf32> -> vector<8x32xf32>
    %c0_20 = arith.constant 0 : index
    %c0_21 = arith.constant 0 : index
    %24 = vector.load %arg9[%c0_20, %c0_21] : memref<1x32xf32, #tpu.memory_space<vmem>>, vector<1x32xf32>
    %25 = vector.broadcast %24 : vector<1x32xf32> to vector<8x32xf32>
    %26 = arith.addf %23, %25 : vector<8x32xf32>
    %c0_22 = arith.constant 0 : index
    %c0_23 = arith.constant 0 : index
    %27 = vector.load %arg10[%c0_22, %c0_23] : memref<8x32xf32, #tpu.memory_space<vmem>>, vector<8x32xf32>
    tpu.vector_store %arg10[%c0_22, %c0_23], %26 {strides = array<i32>} : memref<8x32xf32, #tpu.memory_space<vmem>>, vector<8x32xf32>,
    %c0_24 = arith.constant 0 : index
    %c0_25 = arith.constant 0 : index
    %28 = vector.load %arg11[%c0_24, %c0_25] : memref<8x16xf32, #tpu.memory_space<vmem>>, vector<8x16xf32>
    tpu.vector_store %arg11[%c0_24, %c0_25], %13 {strides = array<i32>} : memref<8x16xf32, #tpu.memory_space<vmem>>, vector<8x16xf32>,
    %c0_26 = arith.constant 0 : index
    %c0_27 = arith.constant 0 : index
    %29 = vector.load %arg12[%c0_26, %c0_27] : memref<8x16xf32, #tpu.memory_space<vmem>>, vector<8x16xf32>
    tpu.vector_store %arg12[%c0_26, %c0_27], %14 {strides = array<i32>} : memref<8x16xf32, #tpu.memory_space<vmem>>, vector<8x16xf32>,
    return
  }
  func.func @transform_0(%arg0: i32) -> (i32, i32) {
    %c0_i32 = arith.constant 0 : i32
    %c0_i32_0 = arith.constant 0 : i32
    return %arg0, %c0_i32 : i32, i32
  }
  func.func @transform_1(%arg0: i32) -> (i32, i32) {
    %c0_i32 = arith.constant 0 : i32
    %c0_i32_0 = arith.constant 0 : i32
    %c0_i32_1 = arith.constant 0 : i32
    return %c0_i32, %c0_i32_0 : i32, i32
  }
  func.func @transform_2(%arg0: i32) -> (i32, i32) {
    %c0_i32 = arith.constant 0 : i32
    %c0_i32_0 = arith.constant 0 : i32
    %c0_i32_1 = arith.constant 0 : i32
    return %c0_i32, %c0_i32_0 : i32, i32
  }
  func.func @transform_3(%arg0: i32) -> (i32, i32) {
    %c0_i32 = arith.constant 0 : i32
    %c0_i32_0 = arith.constant 0 : i32
    %c0_i32_1 = arith.constant 0 : i32
    return %c0_i32, %c0_i32_0 : i32, i32
  }
  func.func @transform_4(%arg0: i32) -> (i32, i32) {
    %c0_i32 = arith.constant 0 : i32
    %c0_i32_0 = arith.constant 0 : i32
    %c0_i32_1 = arith.constant 0 : i32
    return %c0_i32, %c0_i32_0 : i32, i32
  }
  func.func @transform_5(%arg0: i32) -> (i32, i32) {
    %c0_i32 = arith.constant 0 : i32
    %c0_i32_0 = arith.constant 0 : i32
    %c0_i32_1 = arith.constant 0 : i32
    return %c0_i32, %c0_i32_0 : i32, i32
  }
  func.func @transform_6(%arg0: i32) -> (i32, i32) {
    %c0_i32 = arith.constant 0 : i32
    %c0_i32_0 = arith.constant 0 : i32
    %c0_i32_1 = arith.constant 0 : i32
    return %c0_i32, %c0_i32_0 : i32, i32
  }
  func.func @transform_7(%arg0: i32) -> (i32, i32) {
    %c0_i32 = arith.constant 0 : i32
    %c0_i32_0 = arith.constant 0 : i32
    %c0_i32_1 = arith.constant 0 : i32
    return %c0_i32, %c0_i32_0 : i32, i32
  }
  func.func @transform_8(%arg0: i32) -> (i32, i32) {
    %c0_i32 = arith.constant 0 : i32
    %c0_i32_0 = arith.constant 0 : i32
    %c0_i32_1 = arith.constant 0 : i32
    return %c0_i32, %c0_i32_0 : i32, i32
  }
  func.func @transform_9(%arg0: i32) -> (i32, i32) {
    %c0_i32 = arith.constant 0 : i32
    %c0_i32_0 = arith.constant 0 : i32
    return %arg0, %c0_i32 : i32, i32
  }
  func.func @transform_10(%arg0: i32) -> (i32, i32) {
    %c0_i32 = arith.constant 0 : i32
    %c0_i32_0 = arith.constant 0 : i32
    return %arg0, %c0_i32 : i32, i32
  }
  func.func @transform_11(%arg0: i32) -> (i32, i32) {
    %c0_i32 = arith.constant 0 : i32
    %c0_i32_0 = arith.constant 0 : i32
    return %arg0, %c0_i32 : i32, i32
  }
}

</mosaic_0001>

<llo_original>
// kernel: tpu_custom_call.1
$region0: #{tpu_custom_call.1}
  #allocation0 [shape = 'u32[]', space=smem, size = 0x4, offset = 0x4, fixed_abs, tag = 'smem constant byte address 0x4 - core index']
  #allocation1 [shape = 'u32[72,128]{1,0:T(1,128)}', space=vmem, size = 0x9000, scoped, tag = 'internal scratch']
  %s0 = inlined_call_operand.vmem [shape: f32[16,32], index: 0, kind: input, shape index: {}]
  %s1 = inlined_call_operand.vmem [shape: f32[32,128], index: 1, kind: input, shape index: {}]
  %s2 = inlined_call_operand.vmem [shape: f32[1,128], index: 2, kind: input, shape index: {}]
  %s3 = inlined_call_operand.vmem [shape: f32[128,32], index: 3, kind: input, shape index: {}]
  %s4 = inlined_call_operand.vmem [shape: f32[1,32], index: 4, kind: input, shape index: {}]
  %s5 = inlined_call_operand.vmem [shape: f32[16,128], index: 5, kind: input, shape index: {}]
  %s6 = inlined_call_operand.vmem [shape: f32[1,128], index: 6, kind: input, shape index: {}]
  %s7 = inlined_call_operand.vmem [shape: f32[128,32], index: 7, kind: input, shape index: {}]
  %s8 = inlined_call_operand.vmem [shape: f32[1,32], index: 8, kind: input, shape index: {}]
  %s9 = inlined_call_operand.hbm [shape: f32[16,32], index: 9, kind: output, shape index: {0}]
  %s10 = inlined_call_operand.hbm [shape: f32[16,16], index: 10, kind: output, shape index: {1}]
  %s11 = inlined_call_operand.hbm [shape: f32[16,16], index: 11, kind: output, shape index: {2}]
  %12 = xla_tuple %s9, %s10, %s11
  %s13 = sld [smem:[#allocation0]]
  $region85: #{tpu_custom_call.1} parent=0
    _
  %s15 = ssub.s32 1, %s13
  %s16 = scalar_select 0, %s15, %s13
  $region1: #{tpu_custom_call.1} parent=0
    #allocation2 [shape = 'u8[8192]{0}', space=vmem, size = 0x2000, scoped, tag = 'output window, operand 0']
    #allocation3 [shape = 's32[2]{0}', space=sflag, size = 0x8, scoped, tag = 'scoped memory for tpu_custom_call.1']
    #allocation4 [shape = 'u8[8192]{0}', space=vmem, size = 0x2000, scoped, tag = 'output window, operand 1']
    #allocation5 [shape = 's32[2]{0}', space=sflag, size = 0x8, scoped, tag = 'scoped memory for tpu_custom_call.1']
    #allocation6 [shape = 'u8[8192]{0}', space=vmem, size = 0x2000, scoped, tag = 'output window, operand 2']
    %17 = vsyncpa [#allocation3], 0
    %s18 = scalar_lea.sflag [#allocation3], 1
    %19 = vsyncpa %s18, 0
    %20 = vsyncpa [#allocation5], 0
    %s21 = scalar_lea.sflag [#allocation5], 1
    %22 = vsyncpa %s21, 0
    loop: start=0, step=1, limit=4
    $region2: #{tpu_custom_call.1} parent=1 // loop_pre_header
      _
    $region3: #{tpu_custom_call.1} parent=1 // loop_header
      %s24 = sphi 0, %s28
      %p25 = scmp.ge.s32.totalorder %s24, 4
      %s34 = sphi 0, %s36
      %s37 = sphi 0, %s34
      %s38 = sphi 0, %s37
      %s54 = sphi 0, %s38
      %s58 = sphi 0, %s58
      %s60 = sphi 0, %s58
      %s61 = sphi 0, %s60
      %s75 = sphi 0, %s61
      %s79 = sphi 0, %s79
      %s81 = sphi 0, %s79
      %s82 = sphi 0, %s81
      %s96 = sphi 0, %s82
      %s100 = sphi 0, %s100
      %s102 = sphi 0, %s100
      %s103 = sphi 0, %s102
      %s117 = sphi 0, %s103
      %s121 = sphi 0, %s121
      %s123 = sphi 0, %s121
      %s124 = sphi 0, %s123
      %s138 = sphi 0, %s124
      %s142 = sphi 0, %s142
      %s144 = sphi 0, %s142
      %s145 = sphi 0, %s144
      %s159 = sphi 0, %s145
      %s163 = sphi 0, %s163
      %s165 = sphi 0, %s163
      %s166 = sphi 0, %s165
      %s180 = sphi 0, %s166
      %s184 = sphi 0, %s184
      %s186 = sphi 0, %s184
      %s187 = sphi 0, %s186
      %s201 = sphi 0, %s187
      %s205 = sphi 0, %s205
      %s207 = sphi 0, %s205
      %s208 = sphi 0, %s207
      %s222 = sphi 0, %s208
      %s228 = sphi 0, %s230
      %s231 = sphi 0, %s228
      %s232 = sphi 0, %s231
      %s248 = sphi 0, %s232
      %s254 = sphi 0, %s256
      %s257 = sphi 0, %s254
      %s258 = sphi 0, %s257
      %s274 = sphi 0, %s258
      %s280 = sphi 0, %s282
      %s283 = sphi 0, %s280
      %s284 = sphi 0, %s283
      %s300 = sphi 0, %s284
    $region4: #{tpu_custom_call.1} parent=1 // loop_header_branch
      %27 = sbr.rel (%p25) target = $region8
    $region5: #{tpu_custom_call.1} parent=1 // loop_body
      %s29 = ssub.s32 %s24, 1
      %s30 = ssub.s32 %s24, 2
      %s31 = sadd.s32 %s24, 1
      %s32 = ssub.s32 %s24, %s31
      %p33 = scmp.eq.s32.totalorder %s32, 0
      %s35 = sadd.s32 %s34, 1
      %s36 = scalar_select %p33, %s34, %s35
      %p39 = pneg %p33
      %p40 = scmp.eq.s32.totalorder %s24, 1
      %p41 = por %p39, %p40
      %p42 = scmp.ne.s32.totalorder %s34, %s37
      %p43 = scmp.eq.s32.totalorder %s24, 0
      %p44 = por %p42, %p43
      %p45 = scmp.ne.s32.totalorder %s34, %s37
      %p46 = scmp.eq.s32.totalorder %s29, 1
      %p47 = por %p45, %p46
      %p48 = scmp.ne.s32.totalorder %s37, %s38
      %p49 = scmp.eq.s32.totalorder %s29, 0
      %p50 = por %p48, %p49
      %p51 = scmp.ne.s32.totalorder %s37, %s38
      %p52 = scmp.eq.s32.totalorder %s30, 1
      %p53 = por %p51, %p52
      %p55 = scmp.ne.s32.totalorder %s38, %s54
      %p56 = scmp.eq.s32.totalorder %s30, 0
      %p57 = por %p55, %p56
      %s59 = sadd.s32 %s58, 1
      %p62 = scmp.eq.s32.totalorder %s24, 1
      %p63 = scmp.ne.s32.totalorder %s58, %s60
      %p64 = scmp.eq.s32.totalorder %s24, 0
      %p65 = por %p63, %p64
      %p66 = scmp.ne.s32.totalorder %s58, %s60
      %p67 = scmp.eq.s32.totalorder %s29, 1
      %p68 = por %p66, %p67
      %p69 = scmp.ne.s32.totalorder %s60, %s61
      %p70 = scmp.eq.s32.totalorder %s29, 0
      %p71 = por %p69, %p70
      %p72 = scmp.ne.s32.totalorder %s60, %s61
      %p73 = scmp.eq.s32.totalorder %s30, 1
      %p74 = por %p72, %p73
      %p76 = scmp.ne.s32.totalorder %s61, %s75
      %p77 = scmp.eq.s32.totalorder %s30, 0
      %p78 = por %p76, %p77
      %s80 = sadd.s32 %s79, 1
      %p83 = scmp.eq.s32.totalorder %s24, 1
      %p84 = scmp.ne.s32.totalorder %s79, %s81
      %p85 = scmp.eq.s32.totalorder %s24, 0
      %p86 = por %p84, %p85
      %p87 = scmp.ne.s32.totalorder %s79, %s81
      %p88 = scmp.eq.s32.totalorder %s29, 1
      %p89 = por %p87, %p88
      %p90 = scmp.ne.s32.totalorder %s81, %s82
      %p91 = scmp.eq.s32.totalorder %s29, 0
      %p92 = por %p90, %p91
      %p93 = scmp.ne.s32.totalorder %s81, %s82
      %p94 = scmp.eq.s32.totalorder %s30, 1
      %p95 = por %p93, %p94
      %p97 = scmp.ne.s32.totalorder %s82, %s96
      %p98 = scmp.eq.s32.totalorder %s30, 0
      %p99 = por %p97, %p98
      %s101 = sadd.s32 %s100, 1
      %p104 = scmp.eq.s32.totalorder %s24, 1
      %p105 = scmp.ne.s32.totalorder %s100, %s102
      %p106 = scmp.eq.s32.totalorder %s24, 0
      %p107 = por %p105, %p106
      %p108 = scmp.ne.s32.totalorder %s100, %s102
      %p109 = scmp.eq.s32.totalorder %s29, 1
      %p110 = por %p108, %p109
      %p111 = scmp.ne.s32.totalorder %s102, %s103
      %p112 = scmp.eq.s32.totalorder %s29, 0
      %p113 = por %p111, %p112
      %p114 = scmp.ne.s32.totalorder %s102, %s103
      %p115 = scmp.eq.s32.totalorder %s30, 1
      %p116 = por %p114, %p115
      %p118 = scmp.ne.s32.totalorder %s103, %s117
      %p119 = scmp.eq.s32.totalorder %s30, 0
      %p120 = por %p118, %p119
      %s122 = sadd.s32 %s121, 1
      %p125 = scmp.eq.s32.totalorder %s24, 1
      %p126 = scmp.ne.s32.totalorder %s121, %s123
      %p127 = scmp.eq.s32.totalorder %s24, 0
      %p128 = por %p126, %p127
      %p129 = scmp.ne.s32.totalorder %s121, %s123
      %p130 = scmp.eq.s32.totalorder %s29, 1
      %p131 = por %p129, %p130
      %p132 = scmp.ne.s32.totalorder %s123, %s124
      %p133 = scmp.eq.s32.totalorder %s29, 0
      %p134 = por %p132, %p133
      %p135 = scmp.ne.s32.totalorder %s123, %s124
      %p136 = scmp.eq.s32.totalorder %s30, 1
      %p137 = por %p135, %p136
      %p139 = scmp.ne.s32.totalorder %s124, %s138
      %p140 = scmp.eq.s32.totalorder %s30, 0
      %p141 = por %p139, %p140
      %s143 = sadd.s32 %s142, 1
      %p146 = scmp.eq.s32.totalorder %s24, 1
      %p147 = scmp.ne.s32.totalorder %s142, %s144
      %p148 = scmp.eq.s32.totalorder %s24, 0
      %p149 = por %p147, %p148
      %p150 = scmp.ne.s32.totalorder %s142, %s144
      %p151 = scmp.eq.s32.totalorder %s29, 1
      %p152 = por %p150, %p151
      %p153 = scmp.ne.s32.totalorder %s144, %s145
      %p154 = scmp.eq.s32.totalorder %s29, 0
      %p155 = por %p153, %p154
      %p156 = scmp.ne.s32.totalorder %s144, %s145
      %p157 = scmp.eq.s32.totalorder %s30, 1
      %p158 = por %p156, %p157
      %p160 = scmp.ne.s32.totalorder %s145, %s159
      %p161 = scmp.eq.s32.totalorder %s30, 0
      %p162 = por %p160, %p161
      %s164 = sadd.s32 %s163, 1
      %p167 = scmp.eq.s32.totalorder %s24, 1
      %p168 = scmp.ne.s32.totalorder %s163, %s165
      %p169 = scmp.eq.s32.totalorder %s24, 0
      %p170 = por %p168, %p169
      %p171 = scmp.ne.s32.totalorder %s163, %s165
      %p172 = scmp.eq.s32.totalorder %s29, 1
      %p173 = por %p171, %p172
      %p174 = scmp.ne.s32.totalorder %s165, %s166
      %p175 = scmp.eq.s32.totalorder %s29, 0
      %p176 = por %p174, %p175
      %p177 = scmp.ne.s32.totalorder %s165, %s166
      %p178 = scmp.eq.s32.totalorder %s30, 1
      %p179 = por %p177, %p178
      %p181 = scmp.ne.s32.totalorder %s166, %s180
      %p182 = scmp.eq.s32.totalorder %s30, 0
      %p183 = por %p181, %p182
      %s185 = sadd.s32 %s184, 1
      %p188 = scmp.eq.s32.totalorder %s24, 1
      %p189 = scmp.ne.s32.totalorder %s184, %s186
      %p190 = scmp.eq.s32.totalorder %s24, 0
      %p191 = por %p189, %p190
      %p192 = scmp.ne.s32.totalorder %s184, %s186
      %p193 = scmp.eq.s32.totalorder %s29, 1
      %p194 = por %p192, %p193
      %p195 = scmp.ne.s32.totalorder %s186, %s187
      %p196 = scmp.eq.s32.totalorder %s29, 0
      %p197 = por %p195, %p196
      %p198 = scmp.ne.s32.totalorder %s186, %s187
      %p199 = scmp.eq.s32.totalorder %s30, 1
      %p200 = por %p198, %p199
      %p202 = scmp.ne.s32.totalorder %s187, %s201
      %p203 = scmp.eq.s32.totalorder %s30, 0
      %p204 = por %p202, %p203
      %s206 = sadd.s32 %s205, 1
      %p209 = scmp.eq.s32.totalorder %s24, 1
      %p210 = scmp.ne.s32.totalorder %s205, %s207
      %p211 = scmp.eq.s32.totalorder %s24, 0
      %p212 = por %p210, %p211
      %p213 = scmp.ne.s32.totalorder %s205, %s207
      %p214 = scmp.eq.s32.totalorder %s29, 1
      %p215 = por %p213, %p214
      %p216 = scmp.ne.s32.totalorder %s207, %s208
      %p217 = scmp.eq.s32.totalorder %s29, 0
      %p218 = por %p216, %p217
      %p219 = scmp.ne.s32.totalorder %s207, %s208
      %p220 = scmp.eq.s32.totalorder %s30, 1
      %p221 = por %p219, %p220
      %p223 = scmp.ne.s32.totalorder %s208, %s222
      %p224 = scmp.eq.s32.totalorder %s30, 0
      %p225 = por %p223, %p224
      %s226 = ssub.s32 %s24, %s31
      %p227 = scmp.eq.s32.totalorder %s226, 0
      %s229 = sadd.s32 %s228, 1
      %s230 = scalar_select %p227, %s228, %s229
      %p233 = pneg %p227
      %p234 = scmp.eq.s32.totalorder %s24, 1
      %p235 = por %p233, %p234
      %p236 = scmp.ne.s32.totalorder %s228, %s231
      %p237 = scmp.eq.s32.totalorder %s24, 0
      %p238 = por %p236, %p237
      %p239 = scmp.ne.s32.totalorder %s228, %s231
      %p240 = scmp.eq.s32.totalorder %s29, 1
      %p241 = por %p239, %p240
      %p242 = scmp.ne.s32.totalorder %s231, %s232
      %p243 = scmp.eq.s32.totalorder %s29, 0
      %p244 = por %p242, %p243
      %p245 = scmp.ne.s32.totalorder %s231, %s232
      %p246 = scmp.eq.s32.totalorder %s30, 1
      %p247 = por %p245, %p246
      %p249 = scmp.ne.s32.totalorder %s232, %s248
      %p250 = scmp.eq.s32.totalorder %s30, 0
      %p251 = por %p249, %p250
      %s252 = ssub.s32 %s24, %s31
      %p253 = scmp.eq.s32.totalorder %s252, 0
      %s255 = sadd.s32 %s254, 1
      %s256 = scalar_select %p253, %s254, %s255
      %p259 = pneg %p253
      %p260 = scmp.eq.s32.totalorder %s24, 1
      %p261 = por %p259, %p260
      %p262 = scmp.ne.s32.totalorder %s254, %s257
      %p263 = scmp.eq.s32.totalorder %s24, 0
      %p264 = por %p262, %p263
      %p265 = scmp.ne.s32.totalorder %s254, %s257
      %p266 = scmp.eq.s32.totalorder %s29, 1
      %p267 = por %p265, %p266
      %p268 = scmp.ne.s32.totalorder %s257, %s258
      %p269 = scmp.eq.s32.totalorder %s29, 0
      %p270 = por %p268, %p269
      %p271 = scmp.ne.s32.totalorder %s257, %s258
      %p272 = scmp.eq.s32.totalorder %s30, 1
      %p273 = por %p271, %p272
      %p275 = scmp.ne.s32.totalorder %s258, %s274
      %p276 = scmp.eq.s32.totalorder %s30, 0
      %p277 = por %p275, %p276
      %s278 = ssub.s32 %s24, %s31
      %p279 = scmp.eq.s32.totalorder %s278, 0
      %s281 = sadd.s32 %s280, 1
      %s282 = scalar_select %p279, %s280, %s281
      %p285 = pneg %p279
      %p286 = scmp.eq.s32.totalorder %s24, 1
      %p287 = por %p285, %p286
      %p288 = scmp.ne.s32.totalorder %s280, %s283
      %p289 = scmp.eq.s32.totalorder %s24, 0
      %p290 = por %p288, %p289
      %p291 = scmp.ne.s32.totalorder %s280, %s283
      %p292 = scmp.eq.s32.totalorder %s29, 1
      %p293 = por %p291, %p292
      %p294 = scmp.ne.s32.totalorder %s283, %s284
      %p295 = scmp.eq.s32.totalorder %s29, 0
      %p296 = por %p294, %p295
      %p297 = scmp.ne.s32.totalorder %s283, %s284
      %p298 = scmp.eq.s32.totalorder %s30, 1
      %p299 = por %p297, %p298
      %p301 = scmp.ne.s32.totalorder %s284, %s300
      %p302 = scmp.eq.s32.totalorder %s30, 0
      %p303 = por %p301, %p302
      %p304 = scmp.le.s32.totalorder 1, %s24
      %p305 = scmp.lt.s32.totalorder %s24, 3
      %p306 = pnand %p304, %p305
      %p307 = pneg %p306
      // Predicated region
      $region9: #{tpu_custom_call.1} parent=5 // pred_check
        _
      $region10: #{tpu_custom_call.1} parent=5 // pred_check_branch
        %309 = sbr.rel (%p306) target = $region12
      $region11: #{tpu_custom_call.1} parent=5 // pred_region
        %s310 = ssub.s32 %s24, 1
        // Predicated region
        $region13: #{tpu_custom_call.1} parent=11 // pred_check
          %p311 = pneg %p71
        $region14: #{tpu_custom_call.1} parent=11 // pred_check_branch
          %313 = sbr.rel (%p311) target = $region16
        $region15: #{tpu_custom_call.1} parent=11 // pred_region
          _
        $region16: #{tpu_custom_call.1} parent=11 // pred_fallthru
          _
        // Predicated region
        $region17: #{tpu_custom_call.1} parent=11 // pred_check
          %p314 = pneg %p92
        $region18: #{tpu_custom_call.1} parent=11 // pred_check_branch
          %316 = sbr.rel (%p314) target = $region20
        $region19: #{tpu_custom_call.1} parent=11 // pred_region
          _
        $region20: #{tpu_custom_call.1} parent=11 // pred_fallthru
          _
        // Predicated region
        $region21: #{tpu_custom_call.1} parent=11 // pred_check
          %p317 = pneg %p113
        $region22: #{tpu_custom_call.1} parent=11 // pred_check_branch
          %319 = sbr.rel (%p317) target = $region24
        $region23: #{tpu_custom_call.1} parent=11 // pred_region
          _
        $region24: #{tpu_custom_call.1} parent=11 // pred_fallthru
          _
        // Predicated region
        $region25: #{tpu_custom_call.1} parent=11 // pred_check
          %p320 = pneg %p134
        $region26: #{tpu_custom_call.1} parent=11 // pred_check_branch
          %322 = sbr.rel (%p320) target = $region28
        $region27: #{tpu_custom_call.1} parent=11 // pred_region
          _
        $region28: #{tpu_custom_call.1} parent=11 // pred_fallthru
          _
        // Predicated region
        $region29: #{tpu_custom_call.1} parent=11 // pred_check
          %p323 = pneg %p155
        $region30: #{tpu_custom_call.1} parent=11 // pred_check_branch
          %325 = sbr.rel (%p323) target = $region32
        $region31: #{tpu_custom_call.1} parent=11 // pred_region
          _
        $region32: #{tpu_custom_call.1} parent=11 // pred_fallthru
          _
        // Predicated region
        $region33: #{tpu_custom_call.1} parent=11 // pred_check
          %p326 = pneg %p176
        $region34: #{tpu_custom_call.1} parent=11 // pred_check_branch
          %328 = sbr.rel (%p326) target = $region36
        $region35: #{tpu_custom_call.1} parent=11 // pred_region
          _
        $region36: #{tpu_custom_call.1} parent=11 // pred_fallthru
          _
        // Predicated region
        $region37: #{tpu_custom_call.1} parent=11 // pred_check
          %p329 = pneg %p197
        $region38: #{tpu_custom_call.1} parent=11 // pred_check_branch
          %331 = sbr.rel (%p329) target = $region40
        $region39: #{tpu_custom_call.1} parent=11 // pred_region
          _
        $region40: #{tpu_custom_call.1} parent=11 // pred_fallthru
          _
        // Predicated region
        $region41: #{tpu_custom_call.1} parent=11 // pred_check
          %p332 = pneg %p218
        $region42: #{tpu_custom_call.1} parent=11 // pred_check_branch
          %334 = sbr.rel (%p332) target = $region44
        $region43: #{tpu_custom_call.1} parent=11 // pred_region
          _
        $region44: #{tpu_custom_call.1} parent=11 // pred_fallthru
          _
      $region12: #{tpu_custom_call.1} parent=5 // pred_fallthru
        _
      %p335 = scmp.lt.s32.totalorder %s24, 2
      // Predicated region
      $region45: #{tpu_custom_call.1} parent=5 // pred_check
        %p336 = pneg %p335
      $region46: #{tpu_custom_call.1} parent=5 // pred_check_branch
        %338 = sbr.rel (%p336) target = $region48
      $region47: #{tpu_custom_call.1} parent=5 // pred_region
        // Predicated region
        $region49: #{tpu_custom_call.1} parent=47 // pred_check
          %p339 = pneg %p44
        $region50: #{tpu_custom_call.1} parent=47 // pred_check_branch
          %341 = sbr.rel (%p339) target = $region52
        $region51: #{tpu_custom_call.1} parent=47 // pred_region
          %p342 = scmp.lt.s32.totalorder %s24, 1
          %s343 = scalar_select %p342, %s24, 1
          %s344 = smul.addr %s343, 8
          %s345 = scalar_lea.vmem %s0, %s344
        $region52: #{tpu_custom_call.1} parent=47 // pred_fallthru
          _
      $region48: #{tpu_custom_call.1} parent=5 // pred_fallthru
        _
      %p346 = scmp.le.s32.totalorder 1, %s24
      %p347 = scmp.lt.s32.totalorder %s24, 3
      %p348 = pnand %p346, %p347
      %p349 = pneg %p348
      // Predicated region
      $region53: #{tpu_custom_call.1} parent=5 // pred_check
        _
      $region54: #{tpu_custom_call.1} parent=5 // pred_check_branch
        %351 = sbr.rel (%p348) target = $region56
      $region55: #{tpu_custom_call.1} parent=5 // pred_region
        %s352 = ssub.s32 %s24, 1
        %p353 = scmp.lt.s32.totalorder %s29, 1
        %s354 = scalar_select %p353, %s29, 1
        %s355 = smul.addr %s354, 8
        %s356 = scalar_lea.vmem %s0, %s355
        %p357 = pneg %p50
        %p358 = pneg %p47
        %p359 = pneg %p71
        %p360 = pneg %p68
        %p361 = pneg %p92
        %p362 = pneg %p89
        %p363 = pneg %p113
        %p364 = pneg %p110
        %p365 = pneg %p134
        %p366 = pneg %p131
        %p367 = pneg %p155
        %p368 = pneg %p152
        %p369 = pneg %p176
        %p370 = pneg %p173
        %p371 = pneg %p197
        %p372 = pneg %p194
        %p373 = pneg %p218
        %p374 = pneg %p215
        %p375 = pneg %p244
        %p376 = pneg %p241
        %s377 = sand.u32 %s231, 1
        %s378 = scalar_lea.sflag [#allocation3], %s377
        %s379 = sand.u32 %s231, 1
        %s380 = smul.addr %s379, 8
        %s381 = scalar_lea.vmem [#allocation2], %s380
        %p382 = pneg %p270
        %p383 = pneg %p267
        %s384 = sand.u32 %s29, 1
        %s385 = scalar_lea.sflag [#allocation5], %s384
        %s386 = sand.u32 %s257, 1
        %s387 = smul.addr %s386, 8
        %s388 = scalar_lea.vmem [#allocation4], %s387
        %p389 = pneg %p296
        %p390 = pneg %p293
        %s391 = sand.u32 %s29, 1
        %s392 = scalar_lea.sflag [#allocation5], %s391
        %s393 = sand.u32 %s283, 1
        %s394 = smul.addr %s393, 8
        %s395 = scalar_lea.vmem [#allocation6], %s394
        %p396 = scmp.lt.s32.totalorder %s29, 1
        %s397 = scalar_select %p396, %s29, 1
        %s398 = smul.addr %s397, 8
        %s399 = scalar_lea.vmem %s0, %s398
        %v400 = vld [vmem:[%s399] sm:$0xff]
        %v401 = vld [vmem:[%s1] sm:$0xff]
        %v402 = vld [vmem:[%s1 + $0x8] sm:$0xff]
        %v403 = vld [vmem:[%s1 + $0x10] sm:$0xff]
        %v404 = vld [vmem:[%s1 + $0x18] sm:$0xff]
        %v405 = vld [vmem:[%s2] sm:$0x1]
        %v407 = vperm.slane %v405, 0
        %vm409 = vcmask 261120
        %v411 = vsel %vm409, %v400, 0
        %413 = vmatpush.msra.mxu0 0.0
        %414 = vmatpush.msra.mxu0 0.0
        %415 = vmatpush.msra.mxu0 0.0
        %416 = vmatpush.msra.mxu0 0.0
        %417 = vmatpush.msra.mxu0 0.0
        %418 = vmatpush.msra.mxu0 0.0
        %419 = vmatpush.msra.mxu0 0.0
        %420 = vmatpush.msra.mxu0 0.0
        %421 = vmatpush.msra.mxu0 0.0
        %422 = vmatpush.msra.mxu0 0.0
        %423 = vmatpush.msra.mxu0 0.0
        %424 = vmatpush.msra.mxu0 0.0
        %425 = vmatpush.msra.mxu0 %v404
        %426 = vmatpush.msra.mxu0 %v403
        %427 = vmatpush.msra.mxu0 %v402
        %428 = vmatpush.msra.mxu0 %v401
        %429 = vmatmul.f32.gmra.mxu0 %v411
        %v430 = vpop.f32.mrf.mxu0
        %v431 = vadd.f32 %v407, %v430
        %432 = vdwg.mxu0
        %v433 = vmax.f32 %v431, 0.0
        %v434 = vld [vmem:[%s3] sm:$0xff]
        %v435 = vld [vmem:[%s3 + $0x8] sm:$0xff]
        %v436 = vld [vmem:[%s3 + $0x10] sm:$0xff]
        %v437 = vld [vmem:[%s3 + $0x18] sm:$0xff]
        %v438 = vld [vmem:[%s3 + $0x20] sm:$0xff]
        %v439 = vld [vmem:[%s3 + $0x28] sm:$0xff]
        %v440 = vld [vmem:[%s3 + $0x30] sm:$0xff]
        %v441 = vld [vmem:[%s3 + $0x38] sm:$0xff]
        %v442 = vld [vmem:[%s3 + $0x40] sm:$0xff]
        %v443 = vld [vmem:[%s3 + $0x48] sm:$0xff]
        %v444 = vld [vmem:[%s3 + $0x50] sm:$0xff]
        %v445 = vld [vmem:[%s3 + $0x58] sm:$0xff]
        %v446 = vld [vmem:[%s3 + $0x60] sm:$0xff]
        %v447 = vld [vmem:[%s3 + $0x68] sm:$0xff]
        %v448 = vld [vmem:[%s3 + $0x70] sm:$0xff]
        %v449 = vld [vmem:[%s3 + $0x78] sm:$0xff]
        %v450 = vld [vmem:[%s4] sm:$0x1]
        %v452 = vperm.slane %v450, 0
        %454 = vmatpush.msra.mxu0 %v449
        %455 = vmatpush.msra.mxu0 %v448
        %456 = vmatpush.msra.mxu0 %v447
        %457 = vmatpush.msra.mxu0 %v446
        %458 = vmatpush.msra.mxu0 %v445
        %459 = vmatpush.msra.mxu0 %v444
        %460 = vmatpush.msra.mxu0 %v443
        %461 = vmatpush.msra.mxu0 %v442
        %462 = vmatpush.msra.mxu0 %v441
        %463 = vmatpush.msra.mxu0 %v440
        %464 = vmatpush.msra.mxu0 %v439
        %465 = vmatpush.msra.mxu0 %v438
        %466 = vmatpush.msra.mxu0 %v437
        %467 = vmatpush.msra.mxu0 %v436
        %468 = vmatpush.msra.mxu0 %v435
        %469 = vmatpush.msra.mxu0 %v434
        %470 = vmatmul.f32.gmra.mxu0 %v433
        %v471 = vpop.f32.mrf.mxu0
        %v472 = vadd.f32 %v452, %v471
        %473 = vdwg.mxu0
        %v474 = vld [vmem:[%s5] sm:$0xff]
        %v475 = vld [vmem:[%s5 + $0x8] sm:$0xff]
        %v476 = vld [vmem:[%s6] sm:$0x1]
        %v478 = vperm.slane %v476, 0
        %vm480 = vcmask 130048
        %v482 = vsel %vm480, %v472, 0
        %484 = vmatpush.msra.mxu0 0.0
        %485 = vmatpush.msra.mxu0 0.0
        %486 = vmatpush.msra.mxu0 0.0
        %487 = vmatpush.msra.mxu0 0.0
        %488 = vmatpush.msra.mxu0 0.0
        %489 = vmatpush.msra.mxu0 0.0
        %490 = vmatpush.msra.mxu0 0.0
        %491 = vmatpush.msra.mxu0 0.0
        %492 = vmatpush.msra.mxu0 0.0
        %493 = vmatpush.msra.mxu0 0.0
        %494 = vmatpush.msra.mxu0 0.0
        %495 = vmatpush.msra.mxu0 0.0
        %496 = vmatpush.msra.mxu0 0.0
        %497 = vmatpush.msra.mxu0 0.0
        %498 = vmatpush.msra.mxu0 %v475
        %499 = vmatpush.msra.mxu0 %v474
        %500 = vmatmul.f32.gmra.mxu0 %v482
        %v501 = vpop.f32.mrf.mxu0
        %v502 = vadd.f32 %v478, %v501
        %503 = vdwg.mxu0
        %v504 = vmax.f32 %v502, 0.0
        %v505 = vld [vmem:[%s7] sm:$0xff]
        %v506 = vld [vmem:[%s7 + $0x8] sm:$0xff]
        %v507 = vld [vmem:[%s7 + $0x10] sm:$0xff]
        %v508 = vld [vmem:[%s7 + $0x18] sm:$0xff]
        %v509 = vld [vmem:[%s7 + $0x20] sm:$0xff]
        %v510 = vld [vmem:[%s7 + $0x28] sm:$0xff]
        %v511 = vld [vmem:[%s7 + $0x30] sm:$0xff]
        %v512 = vld [vmem:[%s7 + $0x38] sm:$0xff]
        %v513 = vld [vmem:[%s7 + $0x40] sm:$0xff]
        %v514 = vld [vmem:[%s7 + $0x48] sm:$0xff]
        %v515 = vld [vmem:[%s7 + $0x50] sm:$0xff]
        %v516 = vld [vmem:[%s7 + $0x58] sm:$0xff]
        %v517 = vld [vmem:[%s7 + $0x60] sm:$0xff]
        %v518 = vld [vmem:[%s7 + $0x68] sm:$0xff]
        %v519 = vld [vmem:[%s7 + $0x70] sm:$0xff]
        %v520 = vld [vmem:[%s7 + $0x78] sm:$0xff]
        %v521 = vld [vmem:[%s8] sm:$0x1]
        %v523 = vperm.slane %v521, 0
        %525 = vmatpush.msra.mxu0 %v520
        %526 = vmatpush.msra.mxu0 %v519
        %527 = vmatpush.msra.mxu0 %v518
        %528 = vmatpush.msra.mxu0 %v517
        %529 = vmatpush.msra.mxu0 %v516
        %530 = vmatpush.msra.mxu0 %v515
        %531 = vmatpush.msra.mxu0 %v514
        %532 = vmatpush.msra.mxu0 %v513
        %533 = vmatpush.msra.mxu0 %v512
        %534 = vmatpush.msra.mxu0 %v511
        %535 = vmatpush.msra.mxu0 %v510
        %536 = vmatpush.msra.mxu0 %v509
        %537 = vmatpush.msra.mxu0 %v508
        %538 = vmatpush.msra.mxu0 %v507
        %539 = vmatpush.msra.mxu0 %v506
        %540 = vmatpush.msra.mxu0 %v505
        %541 = vmatmul.f32.gmra.mxu0 %v504
        %v542 = vpop.f32.mrf.mxu0
        %v543 = vadd.f32 %v523, %v542
        %544 = vdwg.mxu0
        %545 = vst.msk [vmem:[%s381] sm:$0xff] %vm409, %v543
        %546 = vst.msk [vmem:[%s388] sm:$0xff] %vm480, %v472
        %547 = vrot.lane.b32.xlu0 %v472, 112
        %v548 = vpop.permute.xlu0 %547
        %550 = vst.msk [vmem:[%s395] sm:$0xff] %vm480, %v548
        %s551 = sand.u32 %s231, 1
        %s552 = scalar_lea.sflag [#allocation3], %s551
        %s553 = sand.u32 %s231, 1
        %s554 = smul.addr %s553, 8
        %s555 = scalar_lea.vmem [#allocation2], %s554
        %s556 = sand.u32 %s29, 1
        %s557 = scalar_lea.sflag [#allocation5], %s556
        %s558 = sand.u32 %s257, 1
        %s559 = smul.addr %s558, 8
        %s560 = scalar_lea.vmem [#allocation4], %s559
        %s561 = sand.u32 %s29, 1
        %s562 = scalar_lea.sflag [#allocation5], %s561
        %s563 = sand.u32 %s283, 1
        %s564 = smul.addr %s563, 8
        %s565 = scalar_lea.vmem [#allocation6], %s564
        // Predicated region
        $region57: #{tpu_custom_call.1} parent=55 // pred_check
          %p566 = pneg %p241
        $region58: #{tpu_custom_call.1} parent=55 // pred_check_branch
          %568 = sbr.rel (%p566) target = $region60
        $region59: #{tpu_custom_call.1} parent=55 // pred_region
          %570 = vsyncadd %s552, 0
          %s571 = smul.addr %s29, 8
          %s572 = scalar_lea.hbm %s9, %s571
          %s574 = sshll.u32 %s555, 4
          %s575 = int_to_ptr.vmem [resolvable:$true] %s574
          %s576 = sshll.u32 %s572, 4
          %s577 = int_to_ptr.hbm [resolvable:$true] %s576
          %579 = dma.vmem_to_hbm [thread:$0]  %s575, 128, %s577, %s552
        $region60: #{tpu_custom_call.1} parent=55 // pred_fallthru
          _
        // Predicated region
        $region61: #{tpu_custom_call.1} parent=55 // pred_check
          %p580 = pneg %p267
        $region62: #{tpu_custom_call.1} parent=55 // pred_check_branch
          %582 = sbr.rel (%p580) target = $region64
        $region63: #{tpu_custom_call.1} parent=55 // pred_region
          %584 = vsyncadd %s557, 0
          %s585 = smul.addr %s29, 8
          %s586 = scalar_lea.hbm %s10, %s585
          %s588 = sshll.u32 %s560, 4
          %s589 = int_to_ptr.vmem [resolvable:$true] %s588
          %s590 = sshll.u32 %s586, 4
          %s591 = int_to_ptr.hbm [resolvable:$true] %s590
          %593 = dma.vmem_to_hbm [thread:$0]  %s589, 128, %s591, %s557
        $region64: #{tpu_custom_call.1} parent=55 // pred_fallthru
          _
        // Predicated region
        $region65: #{tpu_custom_call.1} parent=55 // pred_check
          %p594 = pneg %p293
        $region66: #{tpu_custom_call.1} parent=55 // pred_check_branch
          %596 = sbr.rel (%p594) target = $region68
        $region67: #{tpu_custom_call.1} parent=55 // pred_region
          %598 = vsyncadd %s562, 0
          %s599 = smul.addr %s29, 8
          %s600 = scalar_lea.hbm %s11, %s599
          %s602 = sshll.u32 %s565, 4
          %s603 = int_to_ptr.vmem [resolvable:$true] %s602
          %s604 = sshll.u32 %s600, 4
          %s605 = int_to_ptr.hbm [resolvable:$true] %s604
          %607 = dma.vmem_to_hbm [thread:$0]  %s603, 128, %s605, %s562
        $region68: #{tpu_custom_call.1} parent=55 // pred_fallthru
          _
      $region56: #{tpu_custom_call.1} parent=5 // pred_fallthru
        _
      %p608 = scmp.le.s32.totalorder 2, %s24
      // Predicated region
      $region69: #{tpu_custom_call.1} parent=5 // pred_check
        %p609 = pneg %p608
      $region70: #{tpu_custom_call.1} parent=5 // pred_check_branch
        %611 = sbr.rel (%p609) target = $region72
      $region71: #{tpu_custom_call.1} parent=5 // pred_region
        %s612 = ssub.s32 %s24, 2
        // Predicated region
        $region73: #{tpu_custom_call.1} parent=71 // pred_check
          %p613 = pneg %p247
        $region74: #{tpu_custom_call.1} parent=71 // pred_check_branch
          %615 = sbr.rel (%p613) target = $region76
        $region75: #{tpu_custom_call.1} parent=71 // pred_region
          %s616 = sand.u32 %s232, 1
          %s617 = scalar_lea.sflag [#allocation3], %s616
          %s618 = sand.u32 %s232, 1
          %s619 = smul.addr %s618, 8
          %s620 = scalar_lea.vmem [#allocation2], %s619
          %622 = dma.done %s617, 128
        $region76: #{tpu_custom_call.1} parent=71 // pred_fallthru
          _
        // Predicated region
        $region77: #{tpu_custom_call.1} parent=71 // pred_check
          %p623 = pneg %p273
        $region78: #{tpu_custom_call.1} parent=71 // pred_check_branch
          %625 = sbr.rel (%p623) target = $region80
        $region79: #{tpu_custom_call.1} parent=71 // pred_region
          %s626 = sand.u32 %s30, 1
          %s627 = scalar_lea.sflag [#allocation5], %s626
          %s628 = sand.u32 %s258, 1
          %s629 = smul.addr %s628, 8
          %s630 = scalar_lea.vmem [#allocation4], %s629
          %632 = dma.done %s627, 128
        $region80: #{tpu_custom_call.1} parent=71 // pred_fallthru
          _
        // Predicated region
        $region81: #{tpu_custom_call.1} parent=71 // pred_check
          %p633 = pneg %p299
        $region82: #{tpu_custom_call.1} parent=71 // pred_check_branch
          %635 = sbr.rel (%p633) target = $region84
        $region83: #{tpu_custom_call.1} parent=71 // pred_region
          %s636 = sand.u32 %s30, 1
          %s637 = scalar_lea.sflag [#allocation5], %s636
          %s638 = sand.u32 %s284, 1
          %s639 = smul.addr %s638, 8
          %s640 = scalar_lea.vmem [#allocation6], %s639
          %642 = dma.done %s637, 128
        $region84: #{tpu_custom_call.1} parent=71 // pred_fallthru
          _
      $region72: #{tpu_custom_call.1} parent=5 // pred_fallthru
        _
    $region6: #{tpu_custom_call.1} parent=1 // loop_footer
      %s28 = sadd.s32 1, %s24
    $region7: #{tpu_custom_call.1} parent=1 // loop_footer_branch
      %23 = sbr.rel target = $region3
    $region8: #{tpu_custom_call.1} parent=1 // loop_exit
      _
    %643 = vsyncpa [#allocation3], 1
    %s644 = scalar_lea.sflag [#allocation3], 1
    %645 = vsyncpa %s644, 1
    %646 = vsyncpa [#allocation5], 1
    %s647 = scalar_lea.sflag [#allocation5], 1
    %648 = vsyncpa %s647, 1

</llo_original>
